<compile_context>
chip_gen: v7x
topology: tpu7x:2x2x1
jax: 0.10.0
libtpu: 0.0.40
codegen_flags: <defaults>
</compile_context>

<pallas_src>
import functools

import jax
import jax.numpy as jnp
from jax import lax
from jax.experimental import pallas as pl
from jax.experimental.pallas import tpu as pltpu

IN_FEATURES = 4
HIDDEN1 = 64          # output_size in the PyTorch spec
HIDDEN2 = 16          # hidden_output_size in the PyTorch spec
OUT_FEATURES = 3

CHUNK = 512           # columns (batch rows) per inner chunk; multiple of 128
TB_MAX = 8192          # max batch rows per grid step (multiple of CHUNK)


def _round_up(n: int, m: int) -> int:
    return ((n + m - 1) // m) * m


def _auto_tb(batch: int) -> int:
    """Pick the per-step batch tile.

    - tiny batches: one CHUNK-sized step (launch-overhead bound anyway)
    - otherwise: aim for >= 2 grid steps (v7x dual-TensorCore sharding) while
      capping the tile at TB_MAX so per-step VMEM stays modest everywhere.
    """
    if batch <= CHUNK:
        return CHUNK
    half = _round_up((batch + 1) // 2, CHUNK)
    return min(half, TB_MAX)


def iris_mlp_kernel(x_ref, w1_ref, b1_ref, w2_ref, b2_ref, w3_ref, b3_ref, o_ref):
    """One batch tile.

    x_ref: [tb, 4]  f32, batch-major exactly as supplied by the caller.
    o_ref: [3, tb]  f32, feature-major (batch on the 128-lane axis) so output
           stores are unmasked lane-dense vst's.
    """
    tb = x_ref.shape[0]
    n_chunks = tb // CHUNK

    # Weights stay VMEM-resident across all grid steps (constant index_map).
    w1 = w1_ref[...]                                    # [64, 4]
    w2 = w2_ref[...]                                    # [16, 64]
    w3 = w3_ref[...]                                    # [3, 16]
    # Hoist bias broadcasts out of the chunk loop (broadcast_in_dim is not CSE'd).
    b1 = jnp.broadcast_to(b1_ref[...], (HIDDEN1, CHUNK))
    b2 = jnp.broadcast_to(b2_ref[...], (HIDDEN2, CHUNK))
    b3 = jnp.broadcast_to(b3_ref[...], (OUT_FEATURES, CHUNK))

    def chunk_body(c, carry):
        r = pl.multiple_of(c * CHUNK, CHUNK)
        x = x_ref[pl.ds(r, CHUNK), :]                   # [CHUNK, 4] f32

        # Layer 1: W1 @ x^T (trans_b MXU form) -> lane-dense [64, CHUNK].
        h1 = lax.dot_general(
            w1, x, (((1,), (1,)), ((), ())),
            preferred_element_type=jnp.float32) + b1
        h1 = jnp.maximum(h1, 0.0)                       # ReLU

        # Layer 2: Linear(64 -> 16) + ReLU.
        h2 = jnp.dot(w2, h1, preferred_element_type=jnp.float32) + b2
        h2 = jnp.maximum(h2, 0.0)                       # [16, CHUNK]

        # Layer 3: Linear(16 -> 3).
        out = jnp.dot(w3, h2, preferred_element_type=jnp.float32) + b3
        o_ref[:, pl.ds(r, CHUNK)] = out.astype(o_ref.dtype)
        return carry

    lax.fori_loop(0, n_chunks, chunk_body, 0, unroll=True)


@functools.partial(jax.jit, static_argnames=("tb",))
def iris_mlp(x, w1, b1, w2, b2, w3, b3, *, tb=None):
    """Forward pass.  x: [B, 4]; weights/biases in PyTorch convention."""
    B = x.shape[0]
    out_dtype = x.dtype

    if tb is None:
        tb = _auto_tb(B)
    tb = _round_up(tb, CHUNK)
    Bp = _round_up(B, tb)
    n_tiles = Bp // tb

    xf = x.astype(jnp.float32)
    if Bp != B:
        # Explicit zero padding of extra batch rows (no cross-row reduction, and
        # padded output columns are sliced off below).
        xf = jnp.pad(xf, ((0, Bp - B), (0, 0)))

    w1f = w1.astype(jnp.float32)
    w2f = w2.astype(jnp.float32)
    w3f = w3.astype(jnp.float32)
    b1c = b1.reshape(HIDDEN1, 1).astype(jnp.float32)
    b2c = b2.reshape(HIDDEN2, 1).astype(jnp.float32)
    b3c = b3.reshape(OUT_FEATURES, 1).astype(jnp.float32)

    out_t = pl.pallas_call(
        iris_mlp_kernel,
        out_shape=jax.ShapeDtypeStruct((OUT_FEATURES, Bp), jnp.float32),
        grid=(n_tiles,),
        in_specs=[
            pl.BlockSpec((tb, IN_FEATURES), lambda i: (i, 0)),        # x tile
            pl.BlockSpec((HIDDEN1, IN_FEATURES), lambda i: (0, 0)),   # W1 (resident)
            pl.BlockSpec((HIDDEN1, 1), lambda i: (0, 0)),             # b1 (resident)
            pl.BlockSpec((HIDDEN2, HIDDEN1), lambda i: (0, 0)),       # W2 (resident)
            pl.BlockSpec((HIDDEN2, 1), lambda i: (0, 0)),             # b2 (resident)
            pl.BlockSpec((OUT_FEATURES, HIDDEN2), lambda i: (0, 0)),  # W3 (resident)
            pl.BlockSpec((OUT_FEATURES, 1), lambda i: (0, 0)),        # b3 (resident)
        ],
        out_specs=pl.BlockSpec((OUT_FEATURES, tb), lambda i: (0, i)),
        compiler_params=pltpu.CompilerParams(
            dimension_semantics=("parallel",),
            vmem_limit_bytes=32 * 1024 * 1024,
        ),
    )(xf, w1f, b1c, w2f, b2c, w3f, b3c)

    # [3, Bp] -> [B, 3]: a cheap 12 B/row transpose; keeping it here avoids the
    # lane-sparse masked stores a batch-major in-kernel output would require.
    return out_t[:, :B].T.astype(out_dtype)


def init_params(key):
    """PyTorch-style Linear init: uniform in +/- 1/sqrt(fan_in); weight [out, in]."""
    ks = jax.random.split(key, 6)

    def linear_init(kw, kb, fan_in, fan_out):
        bound = 1.0 / jnp.sqrt(jnp.float32(fan_in))
        w = jax.random.uniform(kw, (fan_out, fan_in), jnp.float32, -bound, bound)
        b = jax.random.uniform(kb, (fan_out,), jnp.float32, -bound, bound)
        return w, b

    w1, b1 = linear_init(ks[0], ks[1], IN_FEATURES, HIDDEN1)
    w2, b2 = linear_init(ks[2], ks[3], HIDDEN1, HIDDEN2)
    w3, b3 = linear_init(ks[4], ks[5], HIDDEN2, OUT_FEATURES)
    return w1, b1, w2, b2, w3, b3


def reference(x, w1, b1, w2, b2, w3, b3):
    """Pure-JAX f32 reference mirroring the PyTorch IrisMLP forward."""
    h1 = jnp.maximum(jnp.dot(x, w1.T) + b1[None, :], 0.0)
    h2 = jnp.maximum(jnp.dot(h1, w2.T) + b2[None, :], 0.0)
    return jnp.dot(h2, w3.T) + b3[None, :]


if __name__ == "__main__":
    key = jax.random.PRNGKey(0)
    k_x1, k_x2, k_p = jax.random.split(key, 3)
    params = init_params(k_p)

    # Small shape consistent with the module (Iris features = 4).
    batch = 8
    x = jax.random.normal(k_x1, (batch, IN_FEATURES), jnp.float32)
    out = jax.block_until_ready(iris_mlp(x, *params))
    ref = reference(x, *params)
    assert out.shape == (batch, OUT_FEATURES)
    assert jnp.allclose(out, ref, atol=2e-2, rtol=2e-2), float(
        jnp.max(jnp.abs(out - ref)))

    # Exercise the multi-tile grid + batch-padding path (B not a tile multiple).
    batch2 = 1200
    x2 = jax.random.normal(k_x2, (batch2, IN_FEATURES), jnp.float32)
    out2 = jax.block_until_ready(iris_mlp(x2, *params, tb=512))  # 3 grid steps
    ref2 = reference(x2, *params)
    assert out2.shape == (batch2, OUT_FEATURES)
    assert jnp.allclose(out2, ref2, atol=2e-2, rtol=2e-2), float(
        jnp.max(jnp.abs(out2 - ref2)))

    print("KERNEL_OK")
</pallas_src>

<mosaic_0001>
module attributes {stable_mosaic.version = 11 : i64} {
  func.func @iris_mlp_kernel(%arg0: i32, %arg1: memref<512x4xf32, #tpu.memory_space<vmem>>, %arg2: memref<64x4xf32, #tpu.memory_space<vmem>>, %arg3: memref<64x1xf32, #tpu.memory_space<vmem>>, %arg4: memref<16x64xf32, #tpu.memory_space<vmem>>, %arg5: memref<16x1xf32, #tpu.memory_space<vmem>>, %arg6: memref<3x16xf32, #tpu.memory_space<vmem>>, %arg7: memref<3x1xf32, #tpu.memory_space<vmem>>, %arg8: memref<3x512xf32, #tpu.memory_space<vmem>>) attributes {dimension_semantics = [#tpu.dimension_semantics<parallel>], iteration_bounds = array<i64: 1>, scalar_prefetch = 0 : i64, scratch_operands = 0 : i64, tpu.core_type = #tpu.core_type<tc>, window_params = [{transform_indices = @transform_0, window_bounds = array<i64: 512, 4>}, {pipeline_mode = #tpu.pipeline_mode<synchronous>, transform_indices = @transform_1, window_bounds = array<i64: 64, 4>}, {pipeline_mode = #tpu.pipeline_mode<synchronous>, transform_indices = @transform_2, window_bounds = array<i64: 64, 1>}, {pipeline_mode = #tpu.pipeline_mode<synchronous>, transform_indices = @transform_3, window_bounds = array<i64: 16, 64>}, {pipeline_mode = #tpu.pipeline_mode<synchronous>, transform_indices = @transform_4, window_bounds = array<i64: 16, 1>}, {pipeline_mode = #tpu.pipeline_mode<synchronous>, transform_indices = @transform_5, window_bounds = array<i64: 3, 16>}, {pipeline_mode = #tpu.pipeline_mode<synchronous>, transform_indices = @transform_6, window_bounds = array<i64: 3, 1>}, {transform_indices = @transform_7, window_bounds = array<i64: 3, 512>}]} {
    %c0 = arith.constant 0 : index
    %c0_0 = arith.constant 0 : index
    %0 = vector.load %arg2[%c0, %c0_0] : memref<64x4xf32, #tpu.memory_space<vmem>>, vector<64x4xf32>
    %c0_1 = arith.constant 0 : index
    %c0_2 = arith.constant 0 : index
    %1 = vector.load %arg4[%c0_1, %c0_2] : memref<16x64xf32, #tpu.memory_space<vmem>>, vector<16x64xf32>
    %c0_3 = arith.constant 0 : index
    %c0_4 = arith.constant 0 : index
    %2 = vector.load %arg6[%c0_3, %c0_4] : memref<3x16xf32, #tpu.memory_space<vmem>>, vector<3x16xf32>
    %c0_5 = arith.constant 0 : index
    %c0_6 = arith.constant 0 : index
    %3 = vector.load %arg3[%c0_5, %c0_6] : memref<64x1xf32, #tpu.memory_space<vmem>>, vector<64x1xf32>
    %4 = vector.shape_cast %3 : vector<64x1xf32> to vector<64x1xf32>
    %5 = vector.broadcast %4 : vector<64x1xf32> to vector<64x512xf32>
    %c0_7 = arith.constant 0 : index
    %c0_8 = arith.constant 0 : index
    %6 = vector.load %arg5[%c0_7, %c0_8] : memref<16x1xf32, #tpu.memory_space<vmem>>, vector<16x1xf32>
    %7 = vector.shape_cast %6 : vector<16x1xf32> to vector<16x1xf32>
    %8 = vector.broadcast %7 : vector<16x1xf32> to vector<16x512xf32>
    %c0_9 = arith.constant 0 : index
    %c0_10 = arith.constant 0 : index
    %9 = vector.load %arg7[%c0_9, %c0_10] : memref<3x1xf32, #tpu.memory_space<vmem>>, vector<3x1xf32>
    %10 = vector.shape_cast %9 : vector<3x1xf32> to vector<3x1xf32>
    %11 = vector.broadcast %10 : vector<3x1xf32> to vector<3x512xf32>
    %c0_i32 = arith.constant 0 : i32
    %c512_i32 = arith.constant 512 : i32
    %12 = arith.muli %c0_i32, %c512_i32 : i32
    %13 = tpu.assume_multiple %12, 512 : i32
    %14 = arith.index_cast %13 : i32 to index
    %c0_11 = arith.constant 0 : index
    %15 = vector.load %arg1[%14, %c0_11] : memref<512x4xf32, #tpu.memory_space<vmem>>, vector<512x4xf32>
    %cst = arith.constant dense<0.000000e+00> : vector<64x512xf32>
    %16 = tpu.matmul %0, %15, %cst {dimension_numbers = #tpu.dot_dimension_numbers<[1], [1], [0], [0], [0, 0, 1, 0], [], []>} : vector<64x4xf32>, vector<512x4xf32>, vector<64x512xf32> -> vector<64x512xf32>
    %17 = arith.addf %16, %5 : vector<64x512xf32>
    %cst_12 = arith.constant 0.000000e+00 : f32
    %18 = vector.broadcast %cst_12 : f32 to vector<64x512xf32>
    %19 = arith.maximumf %17, %18 : vector<64x512xf32>
    %cst_13 = arith.constant dense<0.000000e+00> : vector<16x512xf32>
    %20 = tpu.matmul %1, %19, %cst_13 {dimension_numbers = #tpu.dot_dimension_numbers<[1], [0], [0], [1], [0, 0, 1, 1], [], []>} : vector<16x64xf32>, vector<64x512xf32>, vector<16x512xf32> -> vector<16x512xf32>
    %21 = arith.addf %20, %8 : vector<16x512xf32>
    %cst_14 = arith.constant 0.000000e+00 : f32
    %22 = vector.broadcast %cst_14 : f32 to vector<16x512xf32>
    %23 = arith.maximumf %21, %22 : vector<16x512xf32>
    %cst_15 = arith.constant dense<0.000000e+00> : vector<3x512xf32>
    %24 = tpu.matmul %2, %23, %cst_15 {dimension_numbers = #tpu.dot_dimension_numbers<[1], [0], [0], [1], [0, 0, 1, 1], [], []>} : vector<3x16xf32>, vector<16x512xf32>, vector<3x512xf32> -> vector<3x512xf32>
    %25 = arith.addf %24, %11 : vector<3x512xf32>
    %c0_16 = arith.constant 0 : index
    %26 = arith.index_cast %13 : i32 to index
    %27 = vector.load %arg8[%c0_16, %26] : memref<3x512xf32, #tpu.memory_space<vmem>>, vector<3x512xf32>
    tpu.vector_store %arg8[%c0_16, %26], %25 {strides = array<i32>} : memref<3x512xf32, #tpu.memory_space<vmem>>, vector<3x512xf32>,
    %c1_i32 = arith.constant 1 : i32
    return
  }
  func.func @transform_0(%arg0: i32) -> (i32, i32) {
    %c0_i32 = arith.constant 0 : i32
    %c0_i32_0 = arith.constant 0 : i32
    return %arg0, %c0_i32 : i32, i32
  }
  func.func @transform_1(%arg0: i32) -> (i32, i32) {
    %c0_i32 = arith.constant 0 : i32
    %c0_i32_0 = arith.constant 0 : i32
    %c0_i32_1 = arith.constant 0 : i32
    return %c0_i32, %c0_i32_0 : i32, i32
  }
  func.func @transform_2(%arg0: i32) -> (i32, i32) {
    %c0_i32 = arith.constant 0 : i32
    %c0_i32_0 = arith.constant 0 : i32
    %c0_i32_1 = arith.constant 0 : i32
    return %c0_i32, %c0_i32_0 : i32, i32
  }
  func.func @transform_3(%arg0: i32) -> (i32, i32) {
    %c0_i32 = arith.constant 0 : i32
    %c0_i32_0 = arith.constant 0 : i32
    %c0_i32_1 = arith.constant 0 : i32
    return %c0_i32, %c0_i32_0 : i32, i32
  }
  func.func @transform_4(%arg0: i32) -> (i32, i32) {
    %c0_i32 = arith.constant 0 : i32
    %c0_i32_0 = arith.constant 0 : i32
    %c0_i32_1 = arith.constant 0 : i32
    return %c0_i32, %c0_i32_0 : i32, i32
  }
  func.func @transform_5(%arg0: i32) -> (i32, i32) {
    %c0_i32 = arith.constant 0 : i32
    %c0_i32_0 = arith.constant 0 : i32
    %c0_i32_1 = arith.constant 0 : i32
    return %c0_i32, %c0_i32_0 : i32, i32
  }
  func.func @transform_6(%arg0: i32) -> (i32, i32) {
    %c0_i32 = arith.constant 0 : i32
    %c0_i32_0 = arith.constant 0 : i32
    %c0_i32_1 = arith.constant 0 : i32
    return %c0_i32, %c0_i32_0 : i32, i32
  }
  func.func @transform_7(%arg0: i32) -> (i32, i32) {
    %c0_i32 = arith.constant 0 : i32
    %c0_i32_0 = arith.constant 0 : i32
    return %c0_i32, %arg0 : i32, i32
  }
}

</mosaic_0001>

<llo_original>
// kernel: iris_mlp.1
$region0: #{iris_mlp.1}
  #allocation0 [shape = 'u32[]', space=smem, size = 0x4, offset = 0x4, fixed_abs, tag = 'smem constant byte address 0x4 - core index']
  #allocation1 [shape = 'u32[144,128]{1,0:T(1,128)}', space=vmem, size = 0x12000, scoped, tag = 'internal scratch']
  %s0 = inlined_call_operand.vmem [shape: f32[512,4], index: 0, kind: input, shape index: {}]
  %s1 = inlined_call_operand.vmem [shape: f32[64,4], index: 1, kind: input, shape index: {}]
  %s2 = inlined_call_operand.vmem [shape: f32[64,1], index: 2, kind: input, shape index: {}]
  %s3 = inlined_call_operand.vmem [shape: f32[16,64], index: 3, kind: input, shape index: {}]
  %s4 = inlined_call_operand.vmem [shape: f32[16,1], index: 4, kind: input, shape index: {}]
  %s5 = inlined_call_operand.vmem [shape: f32[3,16], index: 5, kind: input, shape index: {}]
  %s6 = inlined_call_operand.vmem [shape: f32[3,1], index: 6, kind: input, shape index: {}]
  %s7 = inlined_call_operand.vmem [shape: f32[3,512], index: 7, kind: output, shape index: {}]
  %s8 = sld [smem:[#allocation0]]
  $region38: #{iris_mlp.1} parent=0
    _
  %s10 = ssub.s32 1, %s8
  %s11 = scalar_select 0, %s10, %s8
  // Predicated region
  $region2: #{iris_mlp.1} parent=0 // pred_check
    _
  $region3: #{iris_mlp.1} parent=0 // pred_check_branch
    %13 = sbr.rel (0) target = $region5
  $region4: #{iris_mlp.1} parent=0 // pred_region
    _
  $region5: #{iris_mlp.1} parent=0 // pred_fallthru
    _
  // Predicated region
  $region6: #{iris_mlp.1} parent=0 // pred_check
    _
  $region7: #{iris_mlp.1} parent=0 // pred_check_branch
    %15 = sbr.rel (0) target = $region9
  $region8: #{iris_mlp.1} parent=0 // pred_region
    _
  $region9: #{iris_mlp.1} parent=0 // pred_fallthru
    _
  // Predicated region
  $region10: #{iris_mlp.1} parent=0 // pred_check
    _
  $region11: #{iris_mlp.1} parent=0 // pred_check_branch
    %17 = sbr.rel (0) target = $region13
  $region12: #{iris_mlp.1} parent=0 // pred_region
    _
  $region13: #{iris_mlp.1} parent=0 // pred_fallthru
    _
  // Predicated region
  $region14: #{iris_mlp.1} parent=0 // pred_check
    _
  $region15: #{iris_mlp.1} parent=0 // pred_check_branch
    %19 = sbr.rel (0) target = $region17
  $region16: #{iris_mlp.1} parent=0 // pred_region
    _
  $region17: #{iris_mlp.1} parent=0 // pred_fallthru
    _
  // Predicated region
  $region18: #{iris_mlp.1} parent=0 // pred_check
    _
  $region19: #{iris_mlp.1} parent=0 // pred_check_branch
    %21 = sbr.rel (0) target = $region21
  $region20: #{iris_mlp.1} parent=0 // pred_region
    _
  $region21: #{iris_mlp.1} parent=0 // pred_fallthru
    _
  // Predicated region
  $region22: #{iris_mlp.1} parent=0 // pred_check
    _
  $region23: #{iris_mlp.1} parent=0 // pred_check_branch
    %23 = sbr.rel (0) target = $region25
  $region24: #{iris_mlp.1} parent=0 // pred_region
    _
  $region25: #{iris_mlp.1} parent=0 // pred_fallthru
    _
  // Predicated region
  $region26: #{iris_mlp.1} parent=0 // pred_check
    _
  $region27: #{iris_mlp.1} parent=0 // pred_check_branch
    %25 = sbr.rel (0) target = $region29
  $region28: #{iris_mlp.1} parent=0 // pred_region
    _
  $region29: #{iris_mlp.1} parent=0 // pred_fallthru
    _
  %v26 = vld [vmem:[%s1] sm:$0xff]
  %v27 = vld [vmem:[%s1 + $0x8] sm:$0xff]
  %v28 = vld [vmem:[%s1 + $0x10] sm:$0xff]
  %v29 = vld [vmem:[%s1 + $0x18] sm:$0xff]
  %v30 = vld [vmem:[%s1 + $0x20] sm:$0xff]
  %v31 = vld [vmem:[%s1 + $0x28] sm:$0xff]
  %v32 = vld [vmem:[%s1 + $0x30] sm:$0xff]
  %v33 = vld [vmem:[%s1 + $0x38] sm:$0xff]
  %v34 = vld [vmem:[%s3] sm:$0xff]
  %v35 = vld [vmem:[%s3 + $0x8] sm:$0xff]
  %v36 = vld [vmem:[%s5] sm:$0x7]
  %v37 = vld [vmem:[%s2] sm:$0xff]
  %v38 = vld [vmem:[%s2 + $0x8] sm:$0xff]
  %v39 = vld [vmem:[%s2 + $0x10] sm:$0xff]
  %v40 = vld [vmem:[%s2 + $0x18] sm:$0xff]
  %v41 = vld [vmem:[%s2 + $0x20] sm:$0xff]
  %v42 = vld [vmem:[%s2 + $0x28] sm:$0xff]
  %v43 = vld [vmem:[%s2 + $0x30] sm:$0xff]
  %v44 = vld [vmem:[%s2 + $0x38] sm:$0xff]
  %46 = vset.pattern.permute.xlu0 0
  %47 = vperm.xlu0 %46, %v37
  %v48 = vpop.permute.xlu0 %47
  %51 = vset.pattern.permute.xlu0 0
  %52 = vperm.xlu0 %51, %v38
  %v53 = vpop.permute.xlu0 %52
  %56 = vset.pattern.permute.xlu0 0
  %57 = vperm.xlu0 %56, %v39
  %v58 = vpop.permute.xlu0 %57
  %61 = vset.pattern.permute.xlu0 0
  %62 = vperm.xlu0 %61, %v40
  %v63 = vpop.permute.xlu0 %62
  %66 = vset.pattern.permute.xlu0 0
  %67 = vperm.xlu0 %66, %v41
  %v68 = vpop.permute.xlu0 %67
  %71 = vset.pattern.permute.xlu0 0
  %72 = vperm.xlu0 %71, %v42
  %v73 = vpop.permute.xlu0 %72
  %76 = vset.pattern.permute.xlu0 0
  %77 = vperm.xlu0 %76, %v43
  %v78 = vpop.permute.xlu0 %77
  %81 = vset.pattern.permute.xlu0 0
  %82 = vperm.xlu0 %81, %v44
  %v83 = vpop.permute.xlu0 %82
  %v85 = vld [vmem:[%s4] sm:$0xff]
  %v86 = vld [vmem:[%s4 + $0x8] sm:$0xff]
  %88 = vset.pattern.permute.xlu0 0
  %89 = vperm.xlu0 %88, %v85
  %v90 = vpop.permute.xlu0 %89
  %93 = vset.pattern.permute.xlu0 0
  %94 = vperm.xlu0 %93, %v86
  %v95 = vpop.permute.xlu0 %94
  %v97 = vld [vmem:[%s6] sm:$0x7]
  %99 = vset.pattern.permute.xlu0 0
  %100 = vperm.xlu0 %99, %v97
  %v101 = vpop.permute.xlu0 %100
  %v103 = vld [vmem:[%s0] sm:$0xff]
  %v104 = vld [vmem:[%s0 + $0x8] sm:$0xff]
  %v105 = vld [vmem:[%s0 + $0x10] sm:$0xff]
  %v106 = vld [vmem:[%s0 + $0x18] sm:$0xff]
  %v107 = vld [vmem:[%s0 + $0x20] sm:$0xff]
  %v108 = vld [vmem:[%s0 + $0x28] sm:$0xff]
  %v109 = vld [vmem:[%s0 + $0x30] sm:$0xff]
  %v110 = vld [vmem:[%s0 + $0x38] sm:$0xff]
  %v111 = vld [vmem:[%s0 + $0x40] sm:$0xff]
  %v112 = vld [vmem:[%s0 + $0x48] sm:$0xff]
  %v113 = vld [vmem:[%s0 + $0x50] sm:$0xff]
  %v114 = vld [vmem:[%s0 + $0x58] sm:$0xff]
  %v115 = vld [vmem:[%s0 + $0x60] sm:$0xff]
  %v116 = vld [vmem:[%s0 + $0x68] sm:$0xff]
  %v117 = vld [vmem:[%s0 + $0x70] sm:$0xff]
  %v118 = vld [vmem:[%s0 + $0x78] sm:$0xff]
  %v119 = vld [vmem:[%s0 + $0x80] sm:$0xff]
  %v120 = vld [vmem:[%s0 + $0x88] sm:$0xff]
  %v121 = vld [vmem:[%s0 + $0x90] sm:$0xff]
  %v122 = vld [vmem:[%s0 + $0x98] sm:$0xff]
  %v123 = vld [vmem:[%s0 + $0xa0] sm:$0xff]
  %v124 = vld [vmem:[%s0 + $0xa8] sm:$0xff]
  %v125 = vld [vmem:[%s0 + $0xb0] sm:$0xff]
  %v126 = vld [vmem:[%s0 + $0xb8] sm:$0xff]
  %v127 = vld [vmem:[%s0 + $0xc0] sm:$0xff]
  %v128 = vld [vmem:[%s0 + $0xc8] sm:$0xff]
  %v129 = vld [vmem:[%s0 + $0xd0] sm:$0xff]
  %v130 = vld [vmem:[%s0 + $0xd8] sm:$0xff]
  %v131 = vld [vmem:[%s0 + $0xe0] sm:$0xff]
  %v132 = vld [vmem:[%s0 + $0xe8] sm:$0xff]
  %v133 = vld [vmem:[%s0 + $0xf0] sm:$0xff]
  %v134 = vld [vmem:[%s0 + $0xf8] sm:$0xff]
  %v135 = vld [vmem:[%s0 + $0x100] sm:$0xff]
  %v136 = vld [vmem:[%s0 + $0x108] sm:$0xff]
  %v137 = vld [vmem:[%s0 + $0x110] sm:$0xff]
  %v138 = vld [vmem:[%s0 + $0x118] sm:$0xff]
  %v139 = vld [vmem:[%s0 + $0x120] sm:$0xff]
  %v140 = vld [vmem:[%s0 + $0x128] sm:$0xff]
  %v141 = vld [vmem:[%s0 + $0x130] sm:$0xff]
  %v142 = vld [vmem:[%s0 + $0x138] sm:$0xff]
  %v143 = vld [vmem:[%s0 + $0x140] sm:$0xff]
  %v144 = vld [vmem:[%s0 + $0x148] sm:$0xff]
  %v145 = vld [vmem:[%s0 + $0x150] sm:$0xff]
  %v146 = vld [vmem:[%s0 + $0x158] sm:$0xff]
  %v147 = vld [vmem:[%s0 + $0x160] sm:$0xff]
  %v148 = vld [vmem:[%s0 + $0x168] sm:$0xff]
  %v149 = vld [vmem:[%s0 + $0x170] sm:$0xff]
  %v150 = vld [vmem:[%s0 + $0x178] sm:$0xff]
  %v151 = vld [vmem:[%s0 + $0x180] sm:$0xff]
  %v152 = vld [vmem:[%s0 + $0x188] sm:$0xff]
  %v153 = vld [vmem:[%s0 + $0x190] sm:$0xff]
  %v154 = vld [vmem:[%s0 + $0x198] sm:$0xff]
  %v155 = vld [vmem:[%s0 + $0x1a0] sm:$0xff]
  %v156 = vld [vmem:[%s0 + $0x1a8] sm:$0xff]
  %v157 = vld [vmem:[%s0 + $0x1b0] sm:$0xff]
  %v158 = vld [vmem:[%s0 + $0x1b8] sm:$0xff]
  %v159 = vld [vmem:[%s0 + $0x1c0] sm:$0xff]
  %v160 = vld [vmem:[%s0 + $0x1c8] sm:$0xff]
  %v161 = vld [vmem:[%s0 + $0x1d0] sm:$0xff]
  %v162 = vld [vmem:[%s0 + $0x1d8] sm:$0xff]
  %v163 = vld [vmem:[%s0 + $0x1e0] sm:$0xff]
  %v164 = vld [vmem:[%s0 + $0x1e8] sm:$0xff]
  %v165 = vld [vmem:[%s0 + $0x1f0] sm:$0xff]
  %v166 = vld [vmem:[%s0 + $0x1f8] sm:$0xff]
  %vm167 = vcmask 31744
  %v169 = vsel %vm167, %v26, 0
  %v172 = vsel %vm167, %v27, 0
  %v175 = vsel %vm167, %v28, 0
  %v178 = vsel %vm167, %v29, 0
  %v181 = vsel %vm167, %v30, 0
  %v184 = vsel %vm167, %v31, 0
  %v187 = vsel %vm167, %v32, 0
  %v190 = vsel %vm167, %v33, 0
  %v193 = vsel %vm167, %v103, 0
  %v196 = vsel %vm167, %v104, 0
  %v199 = vsel %vm167, %v105, 0
  %v202 = vsel %vm167, %v106, 0
  %v205 = vsel %vm167, %v107, 0
  %v208 = vsel %vm167, %v108, 0
  %v211 = vsel %vm167, %v109, 0
  %v214 = vsel %vm167, %v110, 0
  %v217 = vsel %vm167, %v111, 0
  %v220 = vsel %vm167, %v112, 0
  %v223 = vsel %vm167, %v113, 0
  %v226 = vsel %vm167, %v114, 0
  %v229 = vsel %vm167, %v115, 0
  %v232 = vsel %vm167, %v116, 0
  %v235 = vsel %vm167, %v117, 0
  %v238 = vsel %vm167, %v118, 0
  %v241 = vsel %vm167, %v119, 0
  %v244 = vsel %vm167, %v120, 0
  %v247 = vsel %vm167, %v121, 0
  %v250 = vsel %vm167, %v122, 0
  %v253 = vsel %vm167, %v123, 0
  %v256 = vsel %vm167, %v124, 0
  %v259 = vsel %vm167, %v125, 0
  %v262 = vsel %vm167, %v126, 0
  %v265 = vsel %vm167, %v127, 0
  %v268 = vsel %vm167, %v128, 0
  %v271 = vsel %vm167, %v129, 0
  %v274 = vsel %vm167, %v130, 0
  %v277 = vsel %vm167, %v131, 0
  %v280 = vsel %vm167, %v132, 0
  %v283 = vsel %vm167, %v133, 0
  %v286 = vsel %vm167, %v134, 0
  %v289 = vsel %vm167, %v135, 0
  %v292 = vsel %vm167, %v136, 0
  %v295 = vsel %vm167, %v137, 0
  %v298 = vsel %vm167, %v138, 0
  %v301 = vsel %vm167, %v139, 0
  %v304 = vsel %vm167, %v140, 0
  %v307 = vsel %vm167, %v141, 0
  %v310 = vsel %vm167, %v142, 0
  %v313 = vsel %vm167, %v143, 0
  %v316 = vsel %vm167, %v144, 0
  %v319 = vsel %vm167, %v145, 0
  %v322 = vsel %vm167, %v146, 0
  %v325 = vsel %vm167, %v147, 0
  %v328 = vsel %vm167, %v148, 0
  %v331 = vsel %vm167, %v149, 0
  %v334 = vsel %vm167, %v150, 0
  %v337 = vsel %vm167, %v151, 0
  %v340 = vsel %vm167, %v152, 0
  %v343 = vsel %vm167, %v153, 0
  %v346 = vsel %vm167, %v154, 0
  %v349 = vsel %vm167, %v155, 0
  %v352 = vsel %vm167, %v156, 0
  %v355 = vsel %vm167, %v157, 0
  %v358 = vsel %vm167, %v158, 0
  %v361 = vsel %vm167, %v159, 0
  %v364 = vsel %vm167, %v160, 0
  %v367 = vsel %vm167, %v161, 0
  %v370 = vsel %vm167, %v162, 0
  %v373 = vsel %vm167, %v163, 0
  %v376 = vsel %vm167, %v164, 0
  %v379 = vsel %vm167, %v165, 0
  %v382 = vsel %vm167, %v166, 0
  %384 = vmatprep.subr.mxu0 0.0
  %385 = vmatpush1.xpose.msra.mxu0 %v193
  %386 = vmatprep.subr.mxu0 0.0
  %387 = vmatpush1.xpose.msra.mxu0 %v196
  %388 = vmatprep.subr.mxu0 0.0
  %389 = vmatpush1.xpose.msra.mxu0 %v199
  %390 = vmatprep.subr.mxu0 0.0
  %391 = vmatpush1.xpose.msra.mxu0 %v202
  %392 = vmatprep.subr.mxu0 0.0
  %393 = vmatpush1.xpose.msra.mxu0 %v205
  %394 = vmatprep.subr.mxu0 0.0
  %395 = vmatpush1.xpose.msra.mxu0 %v208
  %396 = vmatprep.subr.mxu0 0.0
  %397 = vmatpush1.xpose.msra.mxu0 %v211
  %398 = vmatprep.subr.mxu0 0.0
  %399 = vmatpush1.xpose.msra.mxu0 %v214
  %400 = vmatprep.subr.mxu0 0.0
  %401 = vmatpush1.xpose.msra.mxu0 %v217
  %402 = vmatprep.subr.mxu0 0.0
  %403 = vmatpush1.xpose.msra.mxu0 %v220
  %404 = vmatprep.subr.mxu0 0.0
  %405 = vmatpush1.xpose.msra.mxu0 %v223
  %406 = vmatprep.subr.mxu0 0.0
  %407 = vmatpush1.xpose.msra.mxu0 %v226
  %408 = vmatprep.subr.mxu0 0.0
  %409 = vmatpush1.xpose.msra.mxu0 %v229
  %410 = vmatprep.subr.mxu0 0.0
  %411 = vmatpush1.xpose.msra.mxu0 %v232
  %412 = vmatprep.subr.mxu0 0.0
  %413 = vmatpush1.xpose.msra.mxu0 %v235
  %414 = vmatprep.subr.mxu0 0.0
  %415 = vmatpush1.xpose.msra.mxu0 %v238
  %416 = vmatprep.subr.mxu0 0.0
  %417 = vmatpush1.xpose.msra.mxu0 %v241
  %418 = vmatprep.subr.mxu0 0.0
  %419 = vmatpush1.xpose.msra.mxu0 %v244
  %420 = vmatprep.subr.mxu0 0.0
  %421 = vmatpush1.xpose.msra.mxu0 %v247
  %422 = vmatprep.subr.mxu0 0.0
  %423 = vmatpush1.xpose.msra.mxu0 %v250
  %424 = vmatprep.subr.mxu0 0.0
  %425 = vmatpush1.xpose.msra.mxu0 %v253
  %426 = vmatprep.subr.mxu0 0.0
  %427 = vmatpush1.xpose.msra.mxu0 %v256
  %428 = vmatprep.subr.mxu0 0.0
  %429 = vmatpush1.xpose.msra.mxu0 %v259
  %430 = vmatprep.subr.mxu0 0.0
  %431 = vmatpush1.xpose.msra.mxu0 %v262
  %432 = vmatprep.subr.mxu0 0.0
  %433 = vmatpush1.xpose.msra.mxu0 %v265
  %434 = vmatprep.subr.mxu0 0.0
  %435 = vmatpush1.xpose.msra.mxu0 %v268
  %436 = vmatprep.subr.mxu0 0.0
  %437 = vmatpush1.xpose.msra.mxu0 %v271
  %438 = vmatprep.subr.mxu0 0.0
  %439 = vmatpush1.xpose.msra.mxu0 %v274
  %440 = vmatprep.subr.mxu0 0.0
  %441 = vmatpush1.xpose.msra.mxu0 %v277
  %442 = vmatprep.subr.mxu0 0.0
  %443 = vmatpush1.xpose.msra.mxu0 %v280
  %444 = vmatprep.subr.mxu0 0.0
  %445 = vmatpush1.xpose.msra.mxu0 %v283
  %446 = vmatprep.subr.mxu0 0.0
  %447 = vmatpush1.xpose.msra.mxu0 %v286
  %448 = vmatprep.mubr.f32.mxu0 0.0
  %449 = vmatmul.mubr.f32.gmra.mrb[0].mxu0 %v169
  %v450 = vpop.f32.mrb[0].mxu0
  %v451 = vadd.f32 %v48, %v450
  %v452 = vpop.f32.mrb[0].mxu0
  %v453 = vadd.f32 %v48, %v452
  %454 = vmatprep.mubr.f32.mxu0 0.0
  %455 = vmatmul.mubr.f32.gmra.mrb[0].mxu0 %v172
  %v456 = vpop.f32.mrb[0].mxu0
  %v457 = vadd.f32 %v53, %v456
  %v458 = vpop.f32.mrb[0].mxu0
  %v459 = vadd.f32 %v53, %v458
  %460 = vmatprep.mubr.f32.mxu0 0.0
  %461 = vmatmul.mubr.f32.gmra.mrb[0].mxu0 %v175
  %v462 = vpop.f32.mrb[0].mxu0
  %v463 = vadd.f32 %v58, %v462
  %v464 = vpop.f32.mrb[0].mxu0
  %v465 = vadd.f32 %v58, %v464
  %466 = vmatprep.mubr.f32.mxu0 0.0
  %467 = vmatmul.mubr.f32.gmra.mrb[0].mxu0 %v178
  %v468 = vpop.f32.mrb[0].mxu0
  %v469 = vadd.f32 %v63, %v468
  %v470 = vpop.f32.mrb[0].mxu0
  %v471 = vadd.f32 %v63, %v470
  %472 = vmatprep.mubr.f32.mxu0 0.0
  %473 = vmatmul.mubr.f32.gmra.mrb[0].mxu0 %v181
  %v474 = vpop.f32.mrb[0].mxu0
  %v475 = vadd.f32 %v68, %v474
  %v476 = vpop.f32.mrb[0].mxu0
  %v477 = vadd.f32 %v68, %v476
  %478 = vmatprep.mubr.f32.mxu0 0.0
  %479 = vmatmul.mubr.f32.gmra.mrb[0].mxu0 %v184
  %v480 = vpop.f32.mrb[0].mxu0
  %v481 = vadd.f32 %v73, %v480
  %v482 = vpop.f32.mrb[0].mxu0
  %v483 = vadd.f32 %v73, %v482
  %484 = vmatprep.mubr.f32.mxu0 0.0
  %485 = vmatmul.mubr.f32.gmra.mrb[0].mxu0 %v187
  %v486 = vpop.f32.mrb[0].mxu0
  %v487 = vadd.f32 %v78, %v486
  %v488 = vpop.f32.mrb[0].mxu0
  %v489 = vadd.f32 %v78, %v488
  %490 = vmatprep.mubr.f32.mxu0 0.0
  %491 = vmatmul.mubr.f32.gmra.mrb[0].mxu0 %v190
  %v492 = vpop.f32.mrb[0].mxu0
  %v493 = vadd.f32 %v83, %v492
  %v494 = vpop.f32.mrb[0].mxu0
  %v495 = vadd.f32 %v83, %v494
  %496 = vdwg.mxu0
  %497 = vmatprep.subr.mxu0 0.0
  %498 = vmatpush1.xpose.msra.mxu0 %v289
  %499 = vmatprep.subr.mxu0 0.0
  %500 = vmatpush1.xpose.msra.mxu0 %v292
  %501 = vmatprep.subr.mxu0 0.0
  %502 = vmatpush1.xpose.msra.mxu0 %v295
  %503 = vmatprep.subr.mxu0 0.0
  %504 = vmatpush1.xpose.msra.mxu0 %v298
  %505 = vmatprep.subr.mxu0 0.0
  %506 = vmatpush1.xpose.msra.mxu0 %v301
  %507 = vmatprep.subr.mxu0 0.0
  %508 = vmatpush1.xpose.msra.mxu0 %v304
  %509 = vmatprep.subr.mxu0 0.0
  %510 = vmatpush1.xpose.msra.mxu0 %v307
  %511 = vmatprep.subr.mxu0 0.0
  %512 = vmatpush1.xpose.msra.mxu0 %v310
  %513 = vmatprep.subr.mxu0 0.0
  %514 = vmatpush1.xpose.msra.mxu0 %v313
  %515 = vmatprep.subr.mxu0 0.0
  %516 = vmatpush1.xpose.msra.mxu0 %v316
  %517 = vmatprep.subr.mxu0 0.0
  %518 = vmatpush1.xpose.msra.mxu0 %v319
  %519 = vmatprep.subr.mxu0 0.0
  %520 = vmatpush1.xpose.msra.mxu0 %v322
  %521 = vmatprep.subr.mxu0 0.0
  %522 = vmatpush1.xpose.msra.mxu0 %v325
  %523 = vmatprep.subr.mxu0 0.0
  %524 = vmatpush1.xpose.msra.mxu0 %v328
  %525 = vmatprep.subr.mxu0 0.0
  %526 = vmatpush1.xpose.msra.mxu0 %v331
  %527 = vmatprep.subr.mxu0 0.0
  %528 = vmatpush1.xpose.msra.mxu0 %v334
  %529 = vmatprep.subr.mxu0 0.0
  %530 = vmatpush1.xpose.msra.mxu0 %v337
  %531 = vmatprep.subr.mxu0 0.0
  %532 = vmatpush1.xpose.msra.mxu0 %v340
  %533 = vmatprep.subr.mxu0 0.0
  %534 = vmatpush1.xpose.msra.mxu0 %v343
  %535 = vmatprep.subr.mxu0 0.0
  %536 = vmatpush1.xpose.msra.mxu0 %v346
  %537 = vmatprep.subr.mxu0 0.0
  %538 = vmatpush1.xpose.msra.mxu0 %v349
  %539 = vmatprep.subr.mxu0 0.0
  %540 = vmatpush1.xpose.msra.mxu0 %v352
  %541 = vmatprep.subr.mxu0 0.0
  %542 = vmatpush1.xpose.msra.mxu0 %v355
  %543 = vmatprep.subr.mxu0 0.0
  %544 = vmatpush1.xpose.msra.mxu0 %v358
  %545 = vmatprep.subr.mxu0 0.0
  %546 = vmatpush1.xpose.msra.mxu0 %v361
  %547 = vmatprep.subr.mxu0 0.0
  %548 = vmatpush1.xpose.msra.mxu0 %v364
  %549 = vmatprep.subr.mxu0 0.0
  %550 = vmatpush1.xpose.msra.mxu0 %v367
  %551 = vmatprep.subr.mxu0 0.0
  %552 = vmatpush1.xpose.msra.mxu0 %v370
  %553 = vmatprep.subr.mxu0 0.0
  %554 = vmatpush1.xpose.msra.mxu0 %v373
  %555 = vmatprep.subr.mxu0 0.0
  %556 = vmatpush1.xpose.msra.mxu0 %v376
  %557 = vmatprep.subr.mxu0 0.0
  %558 = vmatpush1.xpose.msra.mxu0 %v379
  %559 = vmatprep.subr.mxu0 0.0
  %560 = vmatpush1.xpose.msra.mxu0 %v382
  %561 = vmatprep.mubr.f32.mxu0 0.0
  %562 = vmatmul.mubr.f32.gmra.mrb[0].mxu0 %v169
  %v563 = vpop.f32.mrb[0].mxu0
  %v564 = vadd.f32 %v48, %v563
  %v565 = vpop.f32.mrb[0].mxu0
  %v566 = vadd.f32 %v48, %v565
  %567 = vmatprep.mubr.f32.mxu0 0.0
  %568 = vmatmul.mubr.f32.gmra.mrb[0].mxu0 %v172
  %v569 = vpop.f32.mrb[0].mxu0
  %v570 = vadd.f32 %v53, %v569
  %v571 = vpop.f32.mrb[0].mxu0
  %v572 = vadd.f32 %v53, %v571
  %573 = vmatprep.mubr.f32.mxu0 0.0
  %574 = vmatmul.mubr.f32.gmra.mrb[0].mxu0 %v175
  %v575 = vpop.f32.mrb[0].mxu0
  %v576 = vadd.f32 %v58, %v575
  %v577 = vpop.f32.mrb[0].mxu0
  %v578 = vadd.f32 %v58, %v577
  %579 = vmatprep.mubr.f32.mxu0 0.0
  %580 = vmatmul.mubr.f32.gmra.mrb[0].mxu0 %v178
  %v581 = vpop.f32.mrb[0].mxu0
  %v582 = vadd.f32 %v63, %v581
  %v583 = vpop.f32.mrb[0].mxu0
  %v584 = vadd.f32 %v63, %v583
  %585 = vmatprep.mubr.f32.mxu0 0.0
  %586 = vmatmul.mubr.f32.gmra.mrb[0].mxu0 %v181
  %v587 = vpop.f32.mrb[0].mxu0
  %v588 = vadd.f32 %v68, %v587
  %v589 = vpop.f32.mrb[0].mxu0
  %v590 = vadd.f32 %v68, %v589
  %591 = vmatprep.mubr.f32.mxu0 0.0
  %592 = vmatmul.mubr.f32.gmra.mrb[0].mxu0 %v184
  %v593 = vpop.f32.mrb[0].mxu0
  %v594 = vadd.f32 %v73, %v593
  %v595 = vpop.f32.mrb[0].mxu0
  %v596 = vadd.f32 %v73, %v595
  %597 = vmatprep.mubr.f32.mxu0 0.0
  %598 = vmatmul.mubr.f32.gmra.mrb[0].mxu0 %v187
  %v599 = vpop.f32.mrb[0].mxu0
  %v600 = vadd.f32 %v78, %v599
  %v601 = vpop.f32.mrb[0].mxu0
  %v602 = vadd.f32 %v78, %v601
  %603 = vmatprep.mubr.f32.mxu0 0.0
  %604 = vmatmul.mubr.f32.gmra.mrb[0].mxu0 %v190
  %v605 = vpop.f32.mrb[0].mxu0
  %v606 = vadd.f32 %v83, %v605
  %v607 = vpop.f32.mrb[0].mxu0
  %v608 = vadd.f32 %v83, %v607
  %609 = vdwg.mxu0
  %v610 = vmax.f32 %v451, 0.0
  %v611 = vmax.f32 %v453, 0.0
  %v612 = vmax.f32 %v564, 0.0
  %v613 = vmax.f32 %v566, 0.0
  %v614 = vmax.f32 %v457, 0.0
  %v615 = vmax.f32 %v459, 0.0
  %v616 = vmax.f32 %v570, 0.0
  %v617 = vmax.f32 %v572, 0.0
  %v618 = vmax.f32 %v463, 0.0
  %v619 = vmax.f32 %v465, 0.0
  %v620 = vmax.f32 %v576, 0.0
  %v621 = vmax.f32 %v578, 0.0
  %v622 = vmax.f32 %v469, 0.0
  %v623 = vmax.f32 %v471, 0.0
  %v624 = vmax.f32 %v582, 0.0
  %v625 = vmax.f32 %v584, 0.0
  %v626 = vmax.f32 %v475, 0.0
  %v627 = vmax.f32 %v477, 0.0
  %v628 = vmax.f32 %v588, 0.0
  %v629 = vmax.f32 %v590, 0.0
  %v630 = vmax.f32 %v481, 0.0
  %v631 = vmax.f32 %v483, 0.0
  %v632 = vmax.f32 %v594, 0.0
  %v633 = vmax.f32 %v596, 0.0
  %v634 = vmax.f32 %v487, 0.0
  %v635 = vmax.f32 %v489, 0.0
  %v636 = vmax.f32 %v600, 0.0
  %v637 = vmax.f32 %v602, 0.0
  %v638 = vmax.f32 %v493, 0.0
  %v639 = vmax.f32 %v495, 0.0
  %v640 = vmax.f32 %v606, 0.0
  %v641 = vmax.f32 %v608, 0.0
  %vm642 = vcmask 523264
  %v644 = vsel %vm642, %v34, 0
  %v647 = vsel %vm642, %v35, 0
  %649 = vmatprep.subr.mxu0 %v611
  %650 = vmatpush1.msra.mxu0 %v610
  %651 = vmatprep.subr.mxu0 %v615
  %652 = vmatpush1.msra.mxu0 %v614
  %653 = vmatprep.subr.mxu0 %v619
  %654 = vmatpush1.msra.mxu0 %v618
  %655 = vmatprep.subr.mxu0 %v623
  %656 = vmatpush1.msra.mxu0 %v622
  %657 = vmatprep.subr.mxu0 %v627
  %658 = vmatpush1.msra.mxu0 %v626
  %659 = vmatprep.subr.mxu0 %v631
  %660 = vmatpush1.msra.mxu0 %v630
  %661 = vmatprep.subr.mxu0 %v635
  %662 = vmatpush1.msra.mxu0 %v634
  %663 = vmatprep.subr.mxu0 %v639
  %664 = vmatpush1.msra.mxu0 %v638
  %665 = vmatprep.subr.mxu0 0.0
  %666 = vmatpush1.msra.mxu0 0.0
  %667 = vmatprep.subr.mxu0 0.0
  %668 = vmatpush1.msra.mxu0 0.0
  %669 = vmatprep.subr.mxu0 0.0
  %670 = vmatpush1.msra.mxu0 0.0
  %671 = vmatprep.subr.mxu0 0.0
  %672 = vmatpush1.msra.mxu0 0.0
  %673 = vmatprep.subr.mxu0 0.0
  %674 = vmatpush1.msra.mxu0 0.0
  %675 = vmatprep.subr.mxu0 0.0
  %676 = vmatpush1.msra.mxu0 0.0
  %677 = vmatprep.subr.mxu0 0.0
  %678 = vmatpush1.msra.mxu0 0.0
  %679 = vmatprep.subr.mxu0 0.0
  %680 = vmatpush1.msra.mxu0 0.0
  %681 = vmatprep.subr.mxu0 0.0
  %682 = vmatpush1.msra.mxu0 0.0
  %683 = vmatprep.subr.mxu0 0.0
  %684 = vmatpush1.msra.mxu0 0.0
  %685 = vmatprep.subr.mxu0 0.0
  %686 = vmatpush1.msra.mxu0 0.0
  %687 = vmatprep.subr.mxu0 0.0
  %688 = vmatpush1.msra.mxu0 0.0
  %689 = vmatprep.subr.mxu0 0.0
  %690 = vmatpush1.msra.mxu0 0.0
  %691 = vmatprep.subr.mxu0 0.0
  %692 = vmatpush1.msra.mxu0 0.0
  %693 = vmatprep.subr.mxu0 0.0
  %694 = vmatpush1.msra.mxu0 0.0
  %695 = vmatprep.subr.mxu0 0.0
  %696 = vmatpush1.msra.mxu0 0.0
  %697 = vmatprep.subr.mxu0 0.0
  %698 = vmatpush1.msra.mxu0 0.0
  %699 = vmatprep.subr.mxu0 0.0
  %700 = vmatpush1.msra.mxu0 0.0
  %701 = vmatprep.subr.mxu0 0.0
  %702 = vmatpush1.msra.mxu0 0.0
  %703 = vmatprep.subr.mxu0 0.0
  %704 = vmatpush1.msra.mxu0 0.0
  %705 = vmatprep.subr.mxu0 0.0
  %706 = vmatpush1.msra.mxu0 0.0
  %707 = vmatprep.subr.mxu0 0.0
  %708 = vmatpush1.msra.mxu0 0.0
  %709 = vmatprep.subr.mxu0 0.0
  %710 = vmatpush1.msra.mxu0 0.0
  %711 = vmatprep.subr.mxu0 0.0
  %712 = vmatpush1.msra.mxu0 0.0
  %713 = vmatprep.mubr.f32.mxu0 0.0
  %714 = vmatmul.mubr.f32.gmra.mrb[0].mxu0 %v644
  %v715 = vpop.f32.mrb[0].mxu0
  %v716 = vadd.f32 %v90, %v715
  %v717 = vpop.f32.mrb[0].mxu0
  %v718 = vadd.f32 %v90, %v717
  %719 = vmatprep.mubr.f32.mxu0 0.0
  %720 = vmatmul.mubr.f32.gmra.mrb[0].mxu0 %v647
  %v721 = vpop.f32.mrb[0].mxu0
  %v722 = vadd.f32 %v95, %v721
  %v723 = vpop.f32.mrb[0].mxu0
  %v724 = vadd.f32 %v95, %v723
  %725 = vdwg.mxu0
  %726 = vmatprep.subr.mxu0 %v613
  %727 = vmatpush1.msra.mxu0 %v612
  %728 = vmatprep.subr.mxu0 %v617
  %729 = vmatpush1.msra.mxu0 %v616
  %730 = vmatprep.subr.mxu0 %v621
  %731 = vmatpush1.msra.mxu0 %v620
  %732 = vmatprep.subr.mxu0 %v625
  %733 = vmatpush1.msra.mxu0 %v624
  %734 = vmatprep.subr.mxu0 %v629
  %735 = vmatpush1.msra.mxu0 %v628
  %736 = vmatprep.subr.mxu0 %v633
  %737 = vmatpush1.msra.mxu0 %v632
  %738 = vmatprep.subr.mxu0 %v637
  %739 = vmatpush1.msra.mxu0 %v636
  %740 = vmatprep.subr.mxu0 %v641
  %741 = vmatpush1.msra.mxu0 %v640
  %742 = vmatprep.subr.mxu0 0.0
  %743 = vmatpush1.msra.mxu0 0.0
  %744 = vmatprep.subr.mxu0 0.0
  %745 = vmatpush1.msra.mxu0 0.0
  %746 = vmatprep.subr.mxu0 0.0
  %747 = vmatpush1.msra.mxu0 0.0
  %748 = vmatprep.subr.mxu0 0.0
  %749 = vmatpush1.msra.mxu0 0.0
  %750 = vmatprep.subr.mxu0 0.0
  %751 = vmatpush1.msra.mxu0 0.0
  %752 = vmatprep.subr.mxu0 0.0
  %753 = vmatpush1.msra.mxu0 0.0
  %754 = vmatprep.subr.mxu0 0.0
  %755 = vmatpush1.msra.mxu0 0.0
  %756 = vmatprep.subr.mxu0 0.0
  %757 = vmatpush1.msra.mxu0 0.0
  %758 = vmatprep.subr.mxu0 0.0
  %759 = vmatpush1.msra.mxu0 0.0
  %760 = vmatprep.subr.mxu0 0.0
  %761 = vmatpush1.msra.mxu0 0.0
  %762 = vmatprep.subr.mxu0 0.0
  %763 = vmatpush1.msra.mxu0 0.0
  %764 = vmatprep.subr.mxu0 0.0
  %765 = vmatpush1.msra.mxu0 0.0
  %766 = vmatprep.subr.mxu0 0.0
  %767 = vmatpush1.msra.mxu0 0.0
  %768 = vmatprep.subr.mxu0 0.0
  %769 = vmatpush1.msra.mxu0 0.0
  %770 = vmatprep.subr.mxu0 0.0
  %771 = vmatpush1.msra.mxu0 0.0
  %772 = vmatprep.subr.mxu0 0.0
  %773 = vmatpush1.msra.mxu0 0.0
  %774 = vmatprep.subr.mxu0 0.0
  %775 = vmatpush1.msra.mxu0 0.0
  %776 = vmatprep.subr.mxu0 0.0
  %777 = vmatpush1.msra.mxu0 0.0
  %778 = vmatprep.subr.mxu0 0.0
  %779 = vmatpush1.msra.mxu0 0.0
  %780 = vmatprep.subr.mxu0 0.0
  %781 = vmatpush1.msra.mxu0 0.0
  %782 = vmatprep.subr.mxu0 0.0
  %783 = vmatpush1.msra.mxu0 0.0
  %784 = vmatprep.subr.mxu0 0.0
  %785 = vmatpush1.msra.mxu0 0.0
  %786 = vmatprep.subr.mxu0 0.0
  %787 = vmatpush1.msra.mxu0 0.0
  %788 = vmatprep.subr.mxu0 0.0
  %789 = vmatpush1.msra.mxu0 0.0
  %790 = vmatprep.mubr.f32.mxu0 0.0
  %791 = vmatmul.mubr.f32.gmra.mrb[0].mxu0 %v644
  %v792 = vpop.f32.mrb[0].mxu0
  %v793 = vadd.f32 %v90, %v792
  %v794 = vpop.f32.mrb[0].mxu0
  %v795 = vadd.f32 %v90, %v794
  %796 = vmatprep.mubr.f32.mxu0 0.0
  %797 = vmatmul.mubr.f32.gmra.mrb[0].mxu0 %v647
  %v798 = vpop.f32.mrb[0].mxu0
  %v799 = vadd.f32 %v95, %v798
  %v800 = vpop.f32.mrb[0].mxu0
  %v801 = vadd.f32 %v95, %v800
  %802 = vdwg.mxu0
  %v803 = vmax.f32 %v716, 0.0
  %v804 = vmax.f32 %v718, 0.0
  %v805 = vmax.f32 %v793, 0.0
  %v806 = vmax.f32 %v795, 0.0
  %v807 = vmax.f32 %v722, 0.0
  %v808 = vmax.f32 %v724, 0.0
  %v809 = vmax.f32 %v799, 0.0
  %v810 = vmax.f32 %v801, 0.0
  %vm811 = vcmask 130048
  %v813 = vsel %vm811, %v36, 0
  %815 = vmatprep.subr.mxu0 %v804
  %816 = vmatpush1.msra.mxu0 %v803
  %817 = vmatprep.subr.mxu0 %v808
  %818 = vmatpush1.msra.mxu0 %v807
  %819 = vmatprep.subr.mxu0 0.0
  %820 = vmatpush1.msra.mxu0 0.0
  %821 = vmatprep.subr.mxu0 0.0
  %822 = vmatpush1.msra.mxu0 0.0
  %823 = vmatprep.subr.mxu0 0.0
  %824 = vmatpush1.msra.mxu0 0.0
  %825 = vmatprep.subr.mxu0 0.0
  %826 = vmatpush1.msra.mxu0 0.0
  %827 = vmatprep.subr.mxu0 0.0
  %828 = vmatpush1.msra.mxu0 0.0
  %829 = vmatprep.subr.mxu0 0.0
  %830 = vmatpush1.msra.mxu0 0.0
  %831 = vmatprep.subr.mxu0 0.0
  %832 = vmatpush1.msra.mxu0 0.0
  %833 = vmatprep.subr.mxu0 0.0
  %834 = vmatpush1.msra.mxu0 0.0
  %835 = vmatprep.subr.mxu0 0.0
  %836 = vmatpush1.msra.mxu0 0.0
  %837 = vmatprep.subr.mxu0 0.0
  %838 = vmatpush1.msra.mxu0 0.0
  %839 = vmatprep.subr.mxu0 0.0
  %840 = vmatpush1.msra.mxu0 0.0
  %841 = vmatprep.subr.mxu0 0.0
  %842 = vmatpush1.msra.mxu0 0.0
  %843 = vmatprep.subr.mxu0 0.0
  %844 = vmatpush1.msra.mxu0 0.0
  %845 = vmatprep.subr.mxu0 0.0
  %846 = vmatpush1.msra.mxu0 0.0
  %847 = vmatprep.subr.mxu0 0.0
  %848 = vmatpush1.msra.mxu0 0.0
  %849 = vmatprep.subr.mxu0 0.0
  %850 = vmatpush1.msra.mxu0 0.0
  %851 = vmatprep.subr.mxu0 0.0
  %852 = vmatpush1.msra.mxu0 0.0
  %853 = vmatprep.subr.mxu0 0.0
  %854 = vmatpush1.msra.mxu0 0.0
  %855 = vmatprep.subr.mxu0 0.0
  %856 = vmatpush1.msra.mxu0 0.0
  %857 = vmatprep.subr.mxu0 0.0
  %858 = vmatpush1.msra.mxu0 0.0
  %859 = vmatprep.subr.mxu0 0.0
  %860 = vmatpush1.msra.mxu0 0.0
  %861 = vmatprep.subr.mxu0 0.0
  %862 = vmatpush1.msra.mxu0 0.0
  %863 = vmatprep.subr.mxu0 0.0
  %864 = vmatpush1.msra.mxu0 0.0
  %865 = vmatprep.subr.mxu0 0.0
  %866 = vmatpush1.msra.mxu0 0.0
  %867 = vmatprep.subr.mxu0 0.0
  %868 = vmatpush1.msra.mxu0 0.0
  %869 = vmatprep.subr.mxu0 0.0
  %870 = vmatpush1.msra.mxu0 0.0
  %871 = vmatprep.subr.mxu0 0.0
  %872 = vmatpush1.msra.mxu0 0.0
  %873 = vmatprep.subr.mxu0 0.0
  %874 = vmatpush1.msra.mxu0 0.0
  %875 = vmatprep.subr.mxu0 0.0
  %876 = vmatpush1.msra.mxu0 0.0
  %877 = vmatprep.subr.mxu0 0.0
  %878 = vmatpush1.msra.mxu0 0.0
  %879 = vmatprep.mubr.f32.mxu0 0.0
  %880 = vmatmul.mubr.f32.gmra.mrb[0].mxu0 %v813
  %v881 = vpop.f32.mrb[0].mxu0
  %v882 = vadd.f32 %v101, %v881
  %v883 = vpop.f32.mrb[0].mxu0
  %v884 = vadd.f32 %v101, %v883
  %885 = vdwg.mxu0
  %886 = vmatprep.subr.mxu0 %v806
  %887 = vmatpush1.msra.mxu0 %v805
  %888 = vmatprep.subr.mxu0 %v810
  %889 = vmatpush1.msra.mxu0 %v809
  %890 = vmatprep.subr.mxu0 0.0
  %891 = vmatpush1.msra.mxu0 0.0
  %892 = vmatprep.subr.mxu0 0.0
  %893 = vmatpush1.msra.mxu0 0.0
  %894 = vmatprep.subr.mxu0 0.0
  %895 = vmatpush1.msra.mxu0 0.0
  %896 = vmatprep.subr.mxu0 0.0
  %897 = vmatpush1.msra.mxu0 0.0
  %898 = vmatprep.subr.mxu0 0.0
  %899 = vmatpush1.msra.mxu0 0.0
  %900 = vmatprep.subr.mxu0 0.0
  %901 = vmatpush1.msra.mxu0 0.0
  %902 = vmatprep.subr.mxu0 0.0
  %903 = vmatpush1.msra.mxu0 0.0
  %904 = vmatprep.subr.mxu0 0.0
  %905 = vmatpush1.msra.mxu0 0.0
  %906 = vmatprep.subr.mxu0 0.0
  %907 = vmatpush1.msra.mxu0 0.0
  %908 = vmatprep.subr.mxu0 0.0
  %909 = vmatpush1.msra.mxu0 0.0
  %910 = vmatprep.subr.mxu0 0.0
  %911 = vmatpush1.msra.mxu0 0.0
  %912 = vmatprep.subr.mxu0 0.0
  %913 = vmatpush1.msra.mxu0 0.0
  %914 = vmatprep.subr.mxu0 0.0
  %915 = vmatpush1.msra.mxu0 0.0
  %916 = vmatprep.subr.mxu0 0.0
  %917 = vmatpush1.msra.mxu0 0.0
  %918 = vmatprep.subr.mxu0 0.0
  %919 = vmatpush1.msra.mxu0 0.0
  %920 = vmatprep.subr.mxu0 0.0
  %921 = vmatpush1.msra.mxu0 0.0
  %922 = vmatprep.subr.mxu0 0.0
  %923 = vmatpush1.msra.mxu0 0.0
  %924 = vmatprep.subr.mxu0 0.0
  %925 = vmatpush1.msra.mxu0 0.0
  %926 = vmatprep.subr.mxu0 0.0
  %927 = vmatpush1.msra.mxu0 0.0
  %928 = vmatprep.subr.mxu0 0.0
  %929 = vmatpush1.msra.mxu0 0.0
  %930 = vmatprep.subr.mxu0 0.0
  %931 = vmatpush1.msra.mxu0 0.0
  %932 = vmatprep.subr.mxu0 0.0
  %933 = vmatpush1.msra.mxu0 0.0
  %934 = vmatprep.subr.mxu0 0.0
  %935 = vmatpush1.msra.mxu0 0.0
  %936 = vmatprep.subr.mxu0 0.0
  %937 = vmatpush1.msra.mxu0 0.0
  %938 = vmatprep.subr.mxu0 0.0
  %939 = vmatpush1.msra.mxu0 0.0
  %940 = vmatprep.subr.mxu0 0.0
  %941 = vmatpush1.msra.mxu0 0.0
  %942 = vmatprep.subr.mxu0 0.0
  %943 = vmatpush1.msra.mxu0 0.0
  %944 = vmatprep.subr.mxu0 0.0
  %945 = vmatpush1.msra.mxu0 0.0
  %946 = vmatprep.subr.mxu0 0.0
  %947 = vmatpush1.msra.mxu0 0.0
  %948 = vmatprep.subr.mxu0 0.0
  %949 = vmatpush1.msra.mxu0 0.0
  %950 = vmatprep.mubr.f32.mxu0 0.0
  %951 = vmatmul.mubr.f32.gmra.mrb[0].mxu0 %v813
  %v952 = vpop.f32.mrb[0].mxu0
  %v953 = vadd.f32 %v101, %v952
  %v954 = vpop.f32.mrb[0].mxu0
  %v955 = vadd.f32 %v101, %v954
  %956 = vdwg.mxu0
  %v961 = vcombine.low %v882, %v884
  %v962 = vcombine.low %v953, %v955
  %965 = vst [vmem:[%s7] sm:$0x77] %v961
  %966 = vst [vmem:[%s7 + $0x8] sm:$0x77] %v962
  // Predicated region
  $region30: #{iris_mlp.1} parent=0 // pred_check
    _
  $region31: #{iris_mlp.1} parent=0 // pred_check_branch
    %968 = sbr.rel (0) target = $region33
  $region32: #{iris_mlp.1} parent=0 // pred_region
    _
  $region33: #{iris_mlp.1} parent=0 // pred_fallthru
    _
  // Predicated region
  $region34: #{iris_mlp.1} parent=0 // pred_check
    _
  $region35: #{iris_mlp.1} parent=0 // pred_check_branch
    %970 = sbr.rel (0) target = $region37
  $region36: #{iris_mlp.1} parent=0 // pred_region
    _
  $region37: #{iris_mlp.1} parent=0 // pred_fallthru
    _

</llo_original>
